<compile_context>
chip_gen: v7x
topology: tpu7x:2x2x1
jax: 0.10.0
libtpu: 0.0.40
codegen_flags: <defaults>
</compile_context>

<pallas_src>
import jax
import jax.numpy as jnp
from jax import lax
from jax.experimental import pallas as pl
from jax.experimental.pallas import tpu as pltpu


# Contract the last (K) dim of both operands: D[tm,tk] x W[tn,tk] -> [tm,tn].
_TRANS_B = (((1,), (1,)), ((), ()))


def _gauss_kernel_single(gamma2_ref, bias_ref, d2h_ref, d_ref, w_ref, o_ref):
    """K fits in a single tile: 2D grid (i, j), no reduction axis."""
    acc = lax.dot_general(d_ref[...], w_ref[...], _TRANS_B,
                          preferred_element_type=jnp.float32)
    out = gamma2_ref[...] * (acc - d2h_ref[...]) + bias_ref[...]
    o_ref[...] = out.astype(o_ref.dtype)


def _gauss_kernel_reduce_inplace(gamma2_ref, bias_ref, d2h_ref, d_ref, w_ref,
                                 o_ref):
    """3D grid (i, j, k): accumulate directly into the resident f32 output."""
    k = pl.program_id(2)
    acc = lax.dot_general(d_ref[...], w_ref[...], _TRANS_B,
                          preferred_element_type=jnp.float32)

    @pl.when(k == 0)
    def _():
        o_ref[...] = acc

    @pl.when(k != 0)
    def _():
        o_ref[...] += acc

    @pl.when(k == pl.num_programs(2) - 1)
    def _():
        o_ref[...] = gamma2_ref[...] * (o_ref[...] - d2h_ref[...]) + bias_ref[...]


def _gauss_kernel_reduce_scratch(gamma2_ref, bias_ref, d2h_ref, d_ref, w_ref,
                                 o_ref, acc_ref):
    """3D grid (i, j, k): f32 VMEM accumulator (only for non-f32 outputs)."""
    k = pl.program_id(2)

    @pl.when(k == 0)
    def _():
        acc_ref[...] = jnp.zeros_like(acc_ref)

    acc_ref[...] += lax.dot_general(d_ref[...], w_ref[...], _TRANS_B,
                                    preferred_element_type=jnp.float32)

    @pl.when(k == pl.num_programs(2) - 1)
    def _():
        out = gamma2_ref[...] * (acc_ref[...] - d2h_ref[...]) + bias_ref[...]
        o_ref[...] = out.astype(o_ref.dtype)


def _round_up(x, m):
    return ((x + m - 1) // m) * m


def _weight_spec(block_shape, index_map, buffers):
    """Weight-stream BlockSpec; optional deeper pipelining (safe fallback)."""
    if buffers is not None and buffers > 2 and hasattr(pl, "Buffered"):
        try:
            return pl.BlockSpec(block_shape, index_map,
                                pipeline_mode=pl.Buffered(buffers))
        except TypeError:
            pass
    return pl.BlockSpec(block_shape, index_map)


def gauss_forward(D, weight, gamma, *, operand_dtype=None, tm=None, tn=None,
                  tk=None, weight_buffers=None):
    """Gauss (RBF output) layer forward.

    D: [M, K] inputs, weight: [N, K], gamma: [N].
    Returns gamma * (2*D@W.T - ||d||^2 - ||w||^2), shape [M, N], dtype of D.

    operand_dtype: optional low-precision dtype (e.g. jnp.bfloat16) for the MXU
    operands; norms, gamma, bias and the accumulator stay float32.
    """
    M, K = D.shape
    N, Kw = weight.shape
    assert Kw == K, "weight / in_features mismatch"
    assert gamma.shape == (N,), "gamma must be [out_features]"
    out_dtype = D.dtype

    # ----- wrapper-side f32 precompute (tiny vs. the matmul) ----------------
    d2h = 0.5 * jnp.sum(D.astype(jnp.float32) ** 2, axis=1, keepdims=True)  # [M,1]
    w2 = jnp.sum(weight.astype(jnp.float32) ** 2, axis=1)[None, :]          # [1,N]
    g32 = gamma.astype(jnp.float32)[None, :]                                # [1,N]
    gamma2 = 2.0 * g32               # fold the "2 *" into gamma
    bias = -g32 * w2                 # fused  -gamma * ||w||^2

    # Optional bf16 operand path for the MXU; accumulation stays float32.
    D_op = D if operand_dtype is None else D.astype(operand_dtype)
    W_op = weight if operand_dtype is None else weight.astype(operand_dtype)

    # ----- pad to (8,128)-friendly extents (lane-dense, unmasked stores) ----
    M_pad = _round_up(M, 8) if M <= 256 else _round_up(M, 128)
    N_pad = _round_up(N, 128)
    K_pad = _round_up(K, 128)
    if (M_pad, K_pad) != (M, K):
        D_op = jnp.pad(D_op, ((0, M_pad - M), (0, K_pad - K)))
    if (N_pad, K_pad) != (N, K):
        W_op = jnp.pad(W_op, ((0, N_pad - N), (0, K_pad - K)))
    if M_pad != M:
        d2h = jnp.pad(d2h, ((0, M_pad - M), (0, 0)))
    if N_pad != N:
        gamma2 = jnp.pad(gamma2, ((0, 0), (0, N_pad - N)))
        bias = jnp.pad(bias, ((0, 0), (0, N_pad - N)))

    # ----- tile selection ----------------------------------------------------
    auto_tn = tn is None
    if tm is None:
        if M_pad <= 256:
            tm = M_pad
        else:
            tm = 256 if M_pad % 256 == 0 else 128
    if tn is None:
        if N_pad <= 512:
            tn = N_pad
        elif N_pad % 512 == 0:
            tn = 512
        elif N_pad % 256 == 0:
            tn = 256
        else:
            tn = 128
    if tk is None:
        if K_pad <= 2048:
            tk = K_pad                      # single-K fast path whenever it fits
        else:
            tk = next(c for c in (2048, 1024, 512, 256, 128) if K_pad % c == 0)

    # v7x has two TensorCores sharded via "parallel" grid axes: make sure at
    # least two blocks exist on a parallel axis when the problem allows it.
    if (auto_tn and (M_pad // tm) * (N_pad // tn) == 1
            and N_pad >= 256 and (N_pad // 2) % 128 == 0):
        tn = N_pad // 2

    assert M_pad % tm == 0 and N_pad % tn == 0 and K_pad % tk == 0
    n_i, n_j, n_k = M_pad // tm, N_pad // tn, K_pad // tk

    # ----- explicit VMEM budget (v5e scoped default is only 16 MiB) ---------
    op_bytes = jnp.dtype(D_op.dtype).itemsize
    out_bytes = jnp.dtype(out_dtype).itemsize
    est = (2 * (tm * tk * op_bytes + tn * tk * op_bytes + tm * tn * out_bytes
                + tm * 4 + 2 * tn * 4)
           + tm * tn * 4)
    vmem_limit = int(min(48 * 2 ** 20, max(32 * 2 ** 20, 2 * est)))

    out_shape = jax.ShapeDtypeStruct((M_pad, N_pad), out_dtype)

    if n_k == 1:
        grid_spec = pltpu.PrefetchScalarGridSpec(
            num_scalar_prefetch=0,
            grid=(n_i, n_j),
            in_specs=[
                pl.BlockSpec((1, tn), lambda i, j: (0, j)),       # 2*gamma
                pl.BlockSpec((1, tn), lambda i, j: (0, j)),       # -gamma*||w||^2
                pl.BlockSpec((tm, 1), lambda i, j: (i, 0)),       # 0.5*||d||^2
                pl.BlockSpec((tm, K_pad), lambda i, j: (i, 0)),   # D
                _weight_spec((tn, K_pad), lambda i, j: (j, 0),    # W (trans_b)
                             weight_buffers),
            ],
            out_specs=pl.BlockSpec((tm, tn), lambda i, j: (i, j)),
            scratch_shapes=[],
        )
        kernel = _gauss_kernel_single
        dims = ("parallel", "parallel")
    else:
        in_specs = [
            pl.BlockSpec((1, tn), lambda i, j, k: (0, j)),        # 2*gamma
            pl.BlockSpec((1, tn), lambda i, j, k: (0, j)),        # bias
            pl.BlockSpec((tm, 1), lambda i, j, k: (i, 0)),        # 0.5*||d||^2
            pl.BlockSpec((tm, tk), lambda i, j, k: (i, k)),       # D
            _weight_spec((tn, tk), lambda i, j, k: (j, k),        # W (trans_b)
                         weight_buffers),
        ]
        out_specs = pl.BlockSpec((tm, tn), lambda i, j, k: (i, j))
        if out_dtype == jnp.float32:
            # Output block stays resident across k: accumulate straight into it.
            kernel = _gauss_kernel_reduce_inplace
            scratch = []
        else:
            kernel = _gauss_kernel_reduce_scratch
            scratch = [pltpu.VMEM((tm, tn), jnp.float32)]
        grid_spec = pltpu.PrefetchScalarGridSpec(
            num_scalar_prefetch=0,
            grid=(n_i, n_j, n_k),
            in_specs=in_specs,
            out_specs=out_specs,
            scratch_shapes=scratch,
        )
        dims = ("parallel", "parallel", "arbitrary")

    out = pl.pallas_call(
        kernel,
        out_shape=out_shape,
        grid_spec=grid_spec,
        compiler_params=pltpu.CompilerParams(
            dimension_semantics=dims,
            vmem_limit_bytes=vmem_limit),
    )(gamma2, bias, d2h, D_op, W_op)

    if (M_pad, N_pad) != (M, N):
        out = out[:M, :N]
    return out


def gauss_reference(D, weight, gamma):
    DX = D @ weight.T
    out = -jnp.sum(D ** 2, axis=1, keepdims=True)
    out = out + 2.0 * DX
    out = out - jnp.sum(weight.T ** 2, axis=0, keepdims=True)
    return gamma * out


if __name__ == "__main__":
    # Shapes consistent with the module: batch=8, in_features=256,
    # out_features=128, gamma scalar init = 0.5.
    batch, in_features, out_features = 8, 256, 128
    gamma_val = 0.5

    key = jax.random.PRNGKey(0)
    k_d, k_w = jax.random.split(key)

    D = jax.random.normal(k_d, (batch, in_features), dtype=jnp.float32)
    # nn.init.uniform_(weight, a=0, b=0.1)
    weight = jax.random.uniform(k_w, (out_features, in_features),
                                dtype=jnp.float32, minval=0.0, maxval=0.1)
    gamma = gamma_val * jnp.ones((out_features,), dtype=jnp.float32)

    out = jax.block_until_ready(gauss_forward(D, weight, gamma))
    ref = gauss_reference(D, weight, gamma)
    assert out.shape == (batch, out_features)
    assert jnp.allclose(out, ref, atol=1e-4, rtol=1e-4), "f32 single-K mismatch"

    # K-reduction path (forced tk < K) with in-place f32 output accumulation.
    k_d2, k_w2 = jax.random.split(jax.random.PRNGKey(1))
    D2 = jax.random.normal(k_d2, (128, 1024), dtype=jnp.float32)
    W2 = jax.random.uniform(k_w2, (256, 1024), dtype=jnp.float32,
                            minval=0.0, maxval=0.1)
    g2 = 0.5 * jnp.ones((256,), dtype=jnp.float32)
    out2 = jax.block_until_ready(gauss_forward(D2, W2, g2, tk=512))
    ref2 = gauss_reference(D2, W2, g2)
    assert jnp.allclose(out2, ref2, atol=1e-3, rtol=1e-4), "f32 reduce mismatch"

    # Ragged shapes exercise the wrapper-side padding (masking-by-slicing).
    k_d3, k_w3 = jax.random.split(jax.random.PRNGKey(2))
    D3 = jax.random.normal(k_d3, (5, 200), dtype=jnp.float32)
    W3 = jax.random.uniform(k_w3, (70, 200), dtype=jnp.float32,
                            minval=0.0, maxval=0.1)
    g3 = 0.5 * jnp.ones((70,), dtype=jnp.float32)
    out3 = jax.block_until_ready(gauss_forward(D3, W3, g3))
    ref3 = gauss_reference(D3, W3, g3)
    assert jnp.allclose(out3, ref3, atol=1e-4, rtol=1e-4), "ragged mismatch"

    # Optional bf16-operand MXU path (norms / bias / accumulation stay f32).
    out_bf = jax.block_until_ready(
        gauss_forward(D, weight, gamma, operand_dtype=jnp.bfloat16))
    assert jnp.allclose(out_bf, ref, atol=5e-1, rtol=2e-2), "bf16 path mismatch"

    print("KERNEL_OK")
</pallas_src>

<mosaic_0001>
module attributes {stable_mosaic.version = 11 : i64} {
  func.func @_gauss_kernel_single(%arg0: i32, %arg1: i32, %arg2: memref<1x128xf32, #tpu.memory_space<vmem>>, %arg3: memref<1x128xf32, #tpu.memory_space<vmem>>, %arg4: memref<8x1xf32, #tpu.memory_space<vmem>>, %arg5: memref<8x256xf32, #tpu.memory_space<vmem>>, %arg6: memref<128x256xf32, #tpu.memory_space<vmem>>, %arg7: memref<8x128xf32, #tpu.memory_space<vmem>>) attributes {dimension_semantics = [#tpu.dimension_semantics<parallel>, #tpu.dimension_semantics<parallel>], iteration_bounds = array<i64: 1, 1>, scalar_prefetch = 0 : i64, scratch_operands = 0 : i64, tpu.core_type = #tpu.core_type<tc>, window_params = [{transform_indices = @transform_0, window_bounds = array<i64: 1, 128>}, {transform_indices = @transform_1, window_bounds = array<i64: 1, 128>}, {transform_indices = @transform_2, window_bounds = array<i64: 8, 1>}, {transform_indices = @transform_3, window_bounds = array<i64: 8, 256>}, {transform_indices = @transform_4, window_bounds = array<i64: 128, 256>}, {transform_indices = @transform_5, window_bounds = array<i64: 8, 128>}]} {
    %c0 = arith.constant 0 : index
    %c0_0 = arith.constant 0 : index
    %0 = vector.load %arg5[%c0, %c0_0] : memref<8x256xf32, #tpu.memory_space<vmem>>, vector<8x256xf32>
    %c0_1 = arith.constant 0 : index
    %c0_2 = arith.constant 0 : index
    %1 = vector.load %arg6[%c0_1, %c0_2] : memref<128x256xf32, #tpu.memory_space<vmem>>, vector<128x256xf32>
    %cst = arith.constant dense<0.000000e+00> : vector<8x128xf32>
    %2 = tpu.matmul %0, %1, %cst {dimension_numbers = #tpu.dot_dimension_numbers<[1], [1], [0], [0], [0, 0, 1, 0], [], []>} : vector<8x256xf32>, vector<128x256xf32>, vector<8x128xf32> -> vector<8x128xf32>
    %c0_3 = arith.constant 0 : index
    %c0_4 = arith.constant 0 : index
    %3 = vector.load %arg2[%c0_3, %c0_4] : memref<1x128xf32, #tpu.memory_space<vmem>>, vector<1x128xf32>
    %c0_5 = arith.constant 0 : index
    %c0_6 = arith.constant 0 : index
    %4 = vector.load %arg4[%c0_5, %c0_6] : memref<8x1xf32, #tpu.memory_space<vmem>>, vector<8x1xf32>
    %5 = vector.broadcast %4 : vector<8x1xf32> to vector<8x128xf32>
    %6 = arith.subf %2, %5 : vector<8x128xf32>
    %7 = vector.broadcast %3 : vector<1x128xf32> to vector<8x128xf32>
    %8 = arith.mulf %7, %6 : vector<8x128xf32>
    %c0_7 = arith.constant 0 : index
    %c0_8 = arith.constant 0 : index
    %9 = vector.load %arg3[%c0_7, %c0_8] : memref<1x128xf32, #tpu.memory_space<vmem>>, vector<1x128xf32>
    %10 = vector.broadcast %9 : vector<1x128xf32> to vector<8x128xf32>
    %11 = arith.addf %8, %10 : vector<8x128xf32>
    %c0_9 = arith.constant 0 : index
    %c0_10 = arith.constant 0 : index
    %12 = vector.load %arg7[%c0_9, %c0_10] : memref<8x128xf32, #tpu.memory_space<vmem>>, vector<8x128xf32>
    tpu.vector_store %arg7[%c0_9, %c0_10], %11 {strides = array<i32>} : memref<8x128xf32, #tpu.memory_space<vmem>>, vector<8x128xf32>,
    return
  }
  func.func @transform_0(%arg0: i32, %arg1: i32) -> (i32, i32) {
    %c0_i32 = arith.constant 0 : i32
    %c0_i32_0 = arith.constant 0 : i32
    return %c0_i32, %arg1 : i32, i32
  }
  func.func @transform_1(%arg0: i32, %arg1: i32) -> (i32, i32) {
    %c0_i32 = arith.constant 0 : i32
    %c0_i32_0 = arith.constant 0 : i32
    return %c0_i32, %arg1 : i32, i32
  }
  func.func @transform_2(%arg0: i32, %arg1: i32) -> (i32, i32) {
    %c0_i32 = arith.constant 0 : i32
    %c0_i32_0 = arith.constant 0 : i32
    return %arg0, %c0_i32 : i32, i32
  }
  func.func @transform_3(%arg0: i32, %arg1: i32) -> (i32, i32) {
    %c0_i32 = arith.constant 0 : i32
    %c0_i32_0 = arith.constant 0 : i32
    return %arg0, %c0_i32 : i32, i32
  }
  func.func @transform_4(%arg0: i32, %arg1: i32) -> (i32, i32) {
    %c0_i32 = arith.constant 0 : i32
    %c0_i32_0 = arith.constant 0 : i32
    return %arg1, %c0_i32 : i32, i32
  }
  func.func @transform_5(%arg0: i32, %arg1: i32) -> (i32, i32) {
    %c0_i32 = arith.constant 0 : i32
    return %arg0, %arg1 : i32, i32
  }
}

</mosaic_0001>

<llo_original>
// kernel: tpu_custom_call.1
$region0: #{tpu_custom_call.1}
  #allocation0 [shape = 'u32[]', space=smem, size = 0x4, offset = 0x4, fixed_abs, tag = 'smem constant byte address 0x4 - core index']
  #allocation1 [shape = 'u32[144,128]{1,0:T(1,128)}', space=vmem, size = 0x12000, scoped, tag = 'internal scratch']
  %s0 = inlined_call_operand.vmem [shape: f32[1,128], index: 0, kind: input, shape index: {}]
  %s1 = inlined_call_operand.vmem [shape: f32[1,128], index: 1, kind: input, shape index: {}]
  %s2 = inlined_call_operand.vmem [shape: f32[8,1], index: 2, kind: input, shape index: {}]
  %s3 = inlined_call_operand.vmem [shape: f32[8,256], index: 3, kind: input, shape index: {}]
  %s4 = inlined_call_operand.hbm [shape: f32[128,256], index: 4, kind: input, shape index: {}]
  %s5 = inlined_call_operand.hbm [shape: f32[8,128], index: 5, kind: output, shape index: {}]
  %s6 = sld [smem:[#allocation0]]
  $region34: #{tpu_custom_call.1} parent=0
    _
  %s8 = ssub.s32 1, %s6
  %s9 = scalar_select 0, %s8, %s6
  $region1: #{tpu_custom_call.1} parent=0
    #allocation2 [shape = 'u8[131072]{0}', space=vmem, size = 0x20000, scoped, tag = 'input window, operand 4, single buffered']
    #allocation3 [shape = 's32[1]{0}', space=sflag, size = 0x4, scoped, tag = 'scoped memory for tpu_custom_call.1']
    #allocation4 [shape = 's32[1]{0}', space=sflag, size = 0x4, scoped, tag = 'scoped memory for tpu_custom_call.1']
    #allocation5 [shape = 'u8[4096]{0}', space=vmem, size = 0x1000, scoped, tag = 'output window, operand 0, single buffered']
    %10 = vsyncpa [#allocation3], 0
    %11 = vsyncpa [#allocation4], 0
    // Predicated region
    $region2: #{tpu_custom_call.1} parent=1 // pred_check
      _
    $region3: #{tpu_custom_call.1} parent=1 // pred_check_branch
      %13 = sbr.rel (0) target = $region5
    $region4: #{tpu_custom_call.1} parent=1 // pred_region
      _
    $region5: #{tpu_custom_call.1} parent=1 // pred_fallthru
      _
    // Predicated region
    $region6: #{tpu_custom_call.1} parent=1 // pred_check
      _
    $region7: #{tpu_custom_call.1} parent=1 // pred_check_branch
      %15 = sbr.rel (0) target = $region9
    $region8: #{tpu_custom_call.1} parent=1 // pred_region
      _
    $region9: #{tpu_custom_call.1} parent=1 // pred_fallthru
      _
    // Predicated region
    $region10: #{tpu_custom_call.1} parent=1 // pred_check
      _
    $region11: #{tpu_custom_call.1} parent=1 // pred_check_branch
      %17 = sbr.rel (0) target = $region13
    $region12: #{tpu_custom_call.1} parent=1 // pred_region
      _
    $region13: #{tpu_custom_call.1} parent=1 // pred_fallthru
      _
    // Predicated region
    $region14: #{tpu_custom_call.1} parent=1 // pred_check
      _
    $region15: #{tpu_custom_call.1} parent=1 // pred_check_branch
      %19 = sbr.rel (0) target = $region17
    $region16: #{tpu_custom_call.1} parent=1 // pred_region
      _
    $region17: #{tpu_custom_call.1} parent=1 // pred_fallthru
      _
    // Predicated region
    $region18: #{tpu_custom_call.1} parent=1 // pred_check
      _
    $region19: #{tpu_custom_call.1} parent=1 // pred_check_branch
      %21 = sbr.rel (0) target = $region21
    $region20: #{tpu_custom_call.1} parent=1 // pred_region
      %s23 = ssub.s32 4096, 4096
      %24 = vsyncadd [#allocation3], %s23
      %s25 = sshll.u32 [#allocation2], 4
      %s26 = int_to_ptr.vmem [resolvable:$true] %s25
      %31 = dma.hbm_to_vmem [thread:$0]  %s4, 4096, %s26, [#allocation3], 256, 256, 16
    $region21: #{tpu_custom_call.1} parent=1 // pred_fallthru
      _
    // Predicated region
    $region22: #{tpu_custom_call.1} parent=1 // pred_check
      _
    $region23: #{tpu_custom_call.1} parent=1 // pred_check_branch
      %33 = sbr.rel (0) target = $region25
    $region24: #{tpu_custom_call.1} parent=1 // pred_region
      %34 = dma.done [#allocation3], 4096
    $region25: #{tpu_custom_call.1} parent=1 // pred_fallthru
      _
    %v35 = vld [vmem:[%s3] sm:$0xff]
    %v36 = vld [vmem:[%s3 + $0x8] sm:$0xff]
    %v37 = vld [vmem:[#allocation2] sm:$0xff]
    %v38 = vld [vmem:[#allocation2 + $0x8] sm:$0xff]
    %v39 = vld [vmem:[#allocation2 + $0x10] sm:$0xff]
    %v40 = vld [vmem:[#allocation2 + $0x18] sm:$0xff]
    %v41 = vld [vmem:[#allocation2 + $0x20] sm:$0xff]
    %v42 = vld [vmem:[#allocation2 + $0x28] sm:$0xff]
    %v43 = vld [vmem:[#allocation2 + $0x30] sm:$0xff]
    %v44 = vld [vmem:[#allocation2 + $0x38] sm:$0xff]
    %v45 = vld [vmem:[#allocation2 + $0x40] sm:$0xff]
    %v46 = vld [vmem:[#allocation2 + $0x48] sm:$0xff]
    %v47 = vld [vmem:[#allocation2 + $0x50] sm:$0xff]
    %v48 = vld [vmem:[#allocation2 + $0x58] sm:$0xff]
    %v49 = vld [vmem:[#allocation2 + $0x60] sm:$0xff]
    %v50 = vld [vmem:[#allocation2 + $0x68] sm:$0xff]
    %v51 = vld [vmem:[#allocation2 + $0x70] sm:$0xff]
    %v52 = vld [vmem:[#allocation2 + $0x78] sm:$0xff]
    %v53 = vld [vmem:[#allocation2 + $0x80] sm:$0xff]
    %v54 = vld [vmem:[#allocation2 + $0x88] sm:$0xff]
    %v55 = vld [vmem:[#allocation2 + $0x90] sm:$0xff]
    %v56 = vld [vmem:[#allocation2 + $0x98] sm:$0xff]
    %v57 = vld [vmem:[#allocation2 + $0xa0] sm:$0xff]
    %v58 = vld [vmem:[#allocation2 + $0xa8] sm:$0xff]
    %v59 = vld [vmem:[#allocation2 + $0xb0] sm:$0xff]
    %v60 = vld [vmem:[#allocation2 + $0xb8] sm:$0xff]
    %v61 = vld [vmem:[#allocation2 + $0xc0] sm:$0xff]
    %v62 = vld [vmem:[#allocation2 + $0xc8] sm:$0xff]
    %v63 = vld [vmem:[#allocation2 + $0xd0] sm:$0xff]
    %v64 = vld [vmem:[#allocation2 + $0xd8] sm:$0xff]
    %v65 = vld [vmem:[#allocation2 + $0xe0] sm:$0xff]
    %v66 = vld [vmem:[#allocation2 + $0xe8] sm:$0xff]
    %v67 = vld [vmem:[#allocation2 + $0xf0] sm:$0xff]
    %v68 = vld [vmem:[#allocation2 + $0xf8] sm:$0xff]
    %69 = vmatprep.subr.mxu0 %v38
    %70 = vmatpush1.xpose.msra.mxu0 %v37
    %71 = vmatprep.subr.mxu0 %v40
    %72 = vmatpush1.xpose.msra.mxu0 %v39
    %73 = vmatprep.subr.mxu0 %v42
    %74 = vmatpush1.xpose.msra.mxu0 %v41
    %75 = vmatprep.subr.mxu0 %v44
    %76 = vmatpush1.xpose.msra.mxu0 %v43
    %77 = vmatprep.subr.mxu0 %v46
    %78 = vmatpush1.xpose.msra.mxu0 %v45
    %79 = vmatprep.subr.mxu0 %v48
    %80 = vmatpush1.xpose.msra.mxu0 %v47
    %81 = vmatprep.subr.mxu0 %v50
    %82 = vmatpush1.xpose.msra.mxu0 %v49
    %83 = vmatprep.subr.mxu0 %v52
    %84 = vmatpush1.xpose.msra.mxu0 %v51
    %85 = vmatprep.subr.mxu0 %v54
    %86 = vmatpush1.xpose.msra.mxu0 %v53
    %87 = vmatprep.subr.mxu0 %v56
    %88 = vmatpush1.xpose.msra.mxu0 %v55
    %89 = vmatprep.subr.mxu0 %v58
    %90 = vmatpush1.xpose.msra.mxu0 %v57
    %91 = vmatprep.subr.mxu0 %v60
    %92 = vmatpush1.xpose.msra.mxu0 %v59
    %93 = vmatprep.subr.mxu0 %v62
    %94 = vmatpush1.xpose.msra.mxu0 %v61
    %95 = vmatprep.subr.mxu0 %v64
    %96 = vmatpush1.xpose.msra.mxu0 %v63
    %97 = vmatprep.subr.mxu0 %v66
    %98 = vmatpush1.xpose.msra.mxu0 %v65
    %99 = vmatprep.subr.mxu0 %v68
    %100 = vmatpush1.xpose.msra.mxu0 %v67
    %101 = vmatprep.subr.mxu0 0.0
    %102 = vmatpush1.xpose.msra.mxu0 0.0
    %103 = vmatprep.subr.mxu0 0.0
    %104 = vmatpush1.xpose.msra.mxu0 0.0
    %105 = vmatprep.subr.mxu0 0.0
    %106 = vmatpush1.xpose.msra.mxu0 0.0
    %107 = vmatprep.subr.mxu0 0.0
    %108 = vmatpush1.xpose.msra.mxu0 0.0
    %109 = vmatprep.subr.mxu0 0.0
    %110 = vmatpush1.xpose.msra.mxu0 0.0
    %111 = vmatprep.subr.mxu0 0.0
    %112 = vmatpush1.xpose.msra.mxu0 0.0
    %113 = vmatprep.subr.mxu0 0.0
    %114 = vmatpush1.xpose.msra.mxu0 0.0
    %115 = vmatprep.subr.mxu0 0.0
    %116 = vmatpush1.xpose.msra.mxu0 0.0
    %117 = vmatprep.subr.mxu0 0.0
    %118 = vmatpush1.xpose.msra.mxu0 0.0
    %119 = vmatprep.subr.mxu0 0.0
    %120 = vmatpush1.xpose.msra.mxu0 0.0
    %121 = vmatprep.subr.mxu0 0.0
    %122 = vmatpush1.xpose.msra.mxu0 0.0
    %123 = vmatprep.subr.mxu0 0.0
    %124 = vmatpush1.xpose.msra.mxu0 0.0
    %125 = vmatprep.subr.mxu0 0.0
    %126 = vmatpush1.xpose.msra.mxu0 0.0
    %127 = vmatprep.subr.mxu0 0.0
    %128 = vmatpush1.xpose.msra.mxu0 0.0
    %129 = vmatprep.subr.mxu0 0.0
    %130 = vmatpush1.xpose.msra.mxu0 0.0
    %131 = vmatprep.subr.mxu0 0.0
    %132 = vmatpush1.xpose.msra.mxu0 0.0
    %133 = vmatprep.mubr.f32.mxu0 %v36
    %134 = vmatmul.mubr.f32.gmra.mrb[0].mxu0 %v35
    %v135 = vpop.f32.mrb[0].mxu0
    %v136 = vadd.f32 0.0, %v135
    %v137 = vpop.f32.mrb[0].mxu0
    %138 = vdwg.mxu0
    %v139 = vld [vmem:[%s0] sm:$0x1]
    %v140 = vld [vmem:[%s2] sm:$0xff]
    %142 = vset.pattern.permute.xlu0 0
    %143 = vperm.xlu0 %142, %v140
    %v144 = vpop.permute.xlu0 %143
    %v146 = vsub.f32 %v136, %v144
    %v148 = vlaneseq
    %v149 = vshrl.u32 %v148, 7
    %v150 = vsub.s32 0, %v149
    %v151 = vrot.slane %v139, %v150
    %v153 = vmul.f32 %v151, %v146
    %v154 = vld [vmem:[%s1] sm:$0x1]
    %v156 = vlaneseq
    %v157 = vshrl.u32 %v156, 7
    %v158 = vsub.s32 0, %v157
    %v159 = vrot.slane %v154, %v158
    %v161 = vadd.f32 %v153, %v159
    %162 = vst [vmem:[#allocation5] sm:$0xff] %v161
    // Predicated region
    $region26: #{tpu_custom_call.1} parent=1 // pred_check
      _
    $region27: #{tpu_custom_call.1} parent=1 // pred_check_branch
      %164 = sbr.rel (0) target = $region29
    $region28: #{tpu_custom_call.1} parent=1 // pred_region
      %s166 = ssub.s32 128, 128
      %167 = vsyncadd [#allocation4], %s166
      %s169 = sshll.u32 [#allocation5], 4
      %s170 = int_to_ptr.vmem [resolvable:$true] %s169
      %172 = dma.vmem_to_hbm [thread:$0]  %s170, 128, %s5, [#allocation4]
    $region29: #{tpu_custom_call.1} parent=1 // pred_fallthru
      _
    // Predicated region
    $region30: #{tpu_custom_call.1} parent=1 // pred_check
      _
    $region31: #{tpu_custom_call.1} parent=1 // pred_check_branch
      %174 = sbr.rel (0) target = $region33
    $region32: #{tpu_custom_call.1} parent=1 // pred_region
      %175 = dma.done [#allocation4], 128
    $region33: #{tpu_custom_call.1} parent=1 // pred_fallthru
      _
    %176 = vsyncpa [#allocation3], 1
    %177 = vsyncpa [#allocation4], 1

</llo_original>
